<compile_context>
chip_gen: v5e
topology: v5e:2x2
jax: 0.10.0
libtpu: 0.0.40
codegen_flags: <defaults>
</compile_context>

<pallas_src>
import functools
import math

import jax
import jax.numpy as jnp
from jax.experimental import pallas as pl
from jax.experimental.pallas import tpu as pltpu


def _ms_loss_kernel(x_row_ref, xt_col_ref, mask_ref, out_ref, s_pos, s_neg,
                    *, alpha, beta, base):
    j = pl.program_id(1)

    # Static (trace-time) logsumexp shifts; exact identity, chosen so exp()
    # never overflows given S in [-1, 1] (L2-normalized inputs).
    m_pos = max(alpha * (1.0 - base), 0.0)   # bound on alpha*(S-base); 0 covers add_one
    m_neg = max(beta * (1.0 + base), 0.0)    # bound on beta*(base-S)
    c_pos = alpha * base + m_pos             # exp(alpha*S - c_pos)
    c_neg = beta * base - m_neg              # exp(c_neg - beta*S)

    @pl.when(j == 0)
    def _init():
        s_pos[...] = jnp.zeros_like(s_pos)
        s_neg[...] = jnp.zeros_like(s_neg)

    # (tm, tn) similarity tile on the MXU: bf16 operands, f32 accumulation.
    # RHS is pre-transposed in the wrapper -> plain K-contraction, no vxpose.
    s_tile = jnp.dot(x_row_ref[...], xt_col_ref[...],
                     preferred_element_type=jnp.float32)  # (tm, tn) f32

    m = mask_ref[...]                    # int8 bitfield: bit0 = pos, bit1 = neg
    pos_keep = (m & 1) != 0
    neg_keep = (m & 2) != 0

    # Constant-fold the no-op scales at trace time (default alpha=1).
    sp = s_tile if alpha == 1.0 else alpha * s_tile
    sn = s_tile if beta == 1.0 else beta * s_tile
    pos_e = jnp.exp(sp - c_pos)
    neg_e = jnp.exp(c_neg - sn)

    s_pos[...] += jnp.sum(jnp.where(pos_keep, pos_e, 0.0), axis=1, keepdims=True)
    s_neg[...] += jnp.sum(jnp.where(neg_keep, neg_e, 0.0), axis=1, keepdims=True)

    @pl.when(j == pl.num_programs(1) - 1)
    def _finalize():
        ps = s_pos[...]
        ns = s_neg[...]
        # add_one: the appended zero column contributes exp(0 - m_static).
        pos_val = (jnp.log(ps + math.exp(-m_pos)) + m_pos) * (1.0 / alpha)
        neg_val = (jnp.log(ns + math.exp(-m_neg)) + m_neg) * (1.0 / beta)
        # Rows with no kept elements (sum stayed exactly 0) output 0, matching
        # the torch masked_fill(~any(mask)) behaviour.
        out = (jnp.where(ps > 0.0, pos_val, 0.0)
               + jnp.where(ns > 0.0, neg_val, 0.0))
        out_ref[...] = out.astype(out_ref.dtype)


def _round_up(n, m):
    return ((n + m - 1) // m) * m


def _pick_tile(n_pad, cap):
    """Largest multiple of 128 that divides n_pad and is <= cap."""
    best = 128
    t = 128
    while t <= min(cap, n_pad):
        if n_pad % t == 0:
            best = t
        t += 128
    return best


def multi_similarity_loss(student, miner_outputs, alpha=1.0, beta=50.0, base=0.0):
    """student: (N, D) float. miner_outputs: (a1, p, a2, n) int index arrays.

    Returns (N, 1) float32, matching the torch module's forward.
    """
    N, D = student.shape
    a1, p, a2, n = miner_outputs

    # --- glue (plain JAX, O(N*D)): F.normalize(p=2, dim=1, eps=1e-12) ---
    x = student.astype(jnp.float32)
    norm = jnp.sqrt(jnp.sum(x * x, axis=1, keepdims=True))
    x_n = x / jnp.maximum(norm, 1e-12)

    # --- pad N and D so tiles are TPU-aligned; padded rows/cols/features are
    # zero (contribute 0 to dot products) and masked out of the logsumexp ---
    n_pad = _round_up(N, 128)
    d_pad = _round_up(D, 128)

    # Row tile: cap at 512 but also at n_pad/2 when possible, so the
    # "parallel" axis has >= 2 tiles for megacore sharding on v7x.
    tm_cap = min(512, n_pad // 2) if n_pad >= 256 else 128
    tm = _pick_tile(n_pad, tm_cap)
    # Column (reduction) tile: cap at 2048 so the working set (incl. the
    # materialized f32 S tile + exp temporaries) stays ~16 MiB -> fits v7x's
    # 64 MiB VMEM and leaves double-buffering headroom on v5e/v6e.
    tn = _pick_tile(n_pad, 2048)

    x_pad = jnp.zeros((n_pad, d_pad), jnp.bfloat16).at[:N, :D].set(
        x_n.astype(jnp.bfloat16))
    xt_pad = x_pad.T                     # one-time O(N*D) wrapper transpose

    # --- glue: combined int8 bitfield mask from miner index lists ---
    # bit0 = positive pair, bit1 = negative pair (robust if a pair is in both).
    pos_m = jnp.zeros((n_pad, n_pad), jnp.int8).at[a1, p].set(1)
    neg_m = jnp.zeros((n_pad, n_pad), jnp.int8).at[a2, n].set(2)
    mask = pos_m | neg_m

    kernel = functools.partial(
        _ms_loss_kernel, alpha=float(alpha), beta=float(beta), base=float(base)
    )

    # Scoped-VMEM budget from the chosen tiles: double-buffered inputs + the
    # f32 S tile and exp temporaries (budget 3x), with headroom; capped at
    # 48 MiB so it also fits v7x (64 MiB physical).
    est = (2 * tm * d_pad * 2        # x row tiles, bf16, double-buffered
           + 2 * d_pad * tn * 2      # x^T col tiles, bf16, double-buffered
           + 2 * tm * tn * 1         # combined int8 mask tiles, double-buffered
           + 3 * tm * tn * 4         # f32 S tile + elementwise temporaries
           + 8 * tm * 4)             # accumulators + output
    vmem_limit = int(min(max(int(1.5 * est), 16 * 1024 * 1024), 48 * 1024 * 1024))

    out = pl.pallas_call(
        kernel,
        out_shape=jax.ShapeDtypeStruct((n_pad, 1), jnp.float32),
        grid_spec=pltpu.PrefetchScalarGridSpec(
            num_scalar_prefetch=0,
            grid=(n_pad // tm, n_pad // tn),
            in_specs=[
                pl.BlockSpec((tm, d_pad), lambda i, j: (i, 0)),   # query rows of x_n
                pl.BlockSpec((d_pad, tn), lambda i, j: (0, j)),   # x_n^T key columns
                pl.BlockSpec((tm, tn), lambda i, j: (i, j)),      # int8 bitfield mask
            ],
            out_specs=pl.BlockSpec((tm, 1), lambda i, j: (i, 0)),
            scratch_shapes=[pltpu.VMEM((tm, 1), jnp.float32)] * 2,
        ),
        compiler_params=pltpu.CompilerParams(
            dimension_semantics=("parallel", "arbitrary"),
            vmem_limit_bytes=vmem_limit,
        ),
    )(x_pad, xt_pad, mask)

    return out[:N]


def _reference(student, miner_outputs, alpha=1.0, beta=50.0, base=0.0):
    # Pure-JAX (f32) reference mirroring the intended torch semantics.
    a1, p, a2, n = miner_outputs
    N = student.shape[0]
    x = student / jnp.maximum(
        jnp.sqrt(jnp.sum(student * student, axis=1, keepdims=True)), 1e-12
    )
    S = x @ x.T
    pos_mask = jnp.zeros((N, N), bool).at[a1, p].set(True)
    neg_mask = jnp.zeros((N, N), bool).at[a2, n].set(True)
    fmin = jnp.finfo(jnp.float32).min

    def lse(v, mask):
        vm = jnp.where(mask, v, fmin)
        vm = jnp.concatenate([vm, jnp.zeros((N, 1), v.dtype)], axis=1)
        out = jax.scipy.special.logsumexp(vm, axis=1, keepdims=True)
        return jnp.where(jnp.any(mask, axis=1, keepdims=True), out, 0.0)

    return (1.0 / alpha) * lse(alpha * (S - base), pos_mask) + (1.0 / beta) * lse(
        beta * (base - S), neg_mask
    )


if __name__ == "__main__":
    key = jax.random.PRNGKey(0)
    N, D = 8, 32
    student = jax.random.normal(key, (N, D), dtype=jnp.float32)

    # Synthetic "miner" output: labels [0,0,1,1,2,2,3,3]; positives = same-label
    # pairs (i != j), negatives = different-label pairs.
    labels = jnp.array([0, 0, 1, 1, 2, 2, 3, 3], dtype=jnp.int32)
    same = labels[:, None] == labels[None, :]
    eye = jnp.eye(N, dtype=bool)
    pos_pairs = jnp.argwhere(same & ~eye)
    neg_pairs = jnp.argwhere(~same)
    a1, p = pos_pairs[:, 0], pos_pairs[:, 1]
    a2, n = neg_pairs[:, 0], neg_pairs[:, 1]
    miner_outputs = (a1, p, a2, n)

    out = multi_similarity_loss(student, miner_outputs, alpha=1.0, beta=50.0, base=0.0)
    out = jax.block_until_ready(out)

    ref = _reference(student, miner_outputs, alpha=1.0, beta=50.0, base=0.0)
    assert out.shape == (N, 1)
    # bf16 MXU operands (f32 accumulation) -> slightly looser tolerance than f32.
    assert jnp.allclose(out, ref, atol=3e-2, rtol=3e-2), (out, ref)

    print("KERNEL_OK")
</pallas_src>

<mosaic_0001>
module attributes {stable_mosaic.version = 11 : i64} {
  func.func @_ms_loss_kernel(%arg0: i32, %arg1: i32, %arg2: memref<128x128xbf16, #tpu.memory_space<vmem>>, %arg3: memref<128x128xbf16, #tpu.memory_space<vmem>>, %arg4: memref<128x128xi8, #tpu.memory_space<vmem>>, %arg5: memref<128x1xf32, #tpu.memory_space<vmem>>, %arg6: memref<128x1xf32, #tpu.memory_space<vmem>>, %arg7: memref<128x1xf32, #tpu.memory_space<vmem>>) attributes {dimension_semantics = [#tpu.dimension_semantics<parallel>, #tpu.dimension_semantics<arbitrary>], iteration_bounds = array<i64: 1, 1>, scalar_prefetch = 0 : i64, scratch_operands = 2 : i64, tpu.core_type = #tpu.core_type<tc>, window_params = [{transform_indices = @transform_0, window_bounds = array<i64: 128, 128>}, {transform_indices = @transform_1, window_bounds = array<i64: 128, 128>}, {transform_indices = @transform_2, window_bounds = array<i64: 128, 128>}, {transform_indices = @transform_3, window_bounds = array<i64: 128, 1>}]} {
    %c0_i32 = arith.constant 0 : i32
    %0 = arith.cmpi eq, %arg1, %c0_i32 : i32
    %1 = arith.extui %0 : i1 to i32
    %c0_i32_0 = arith.constant 0 : i32
    %2 = arith.cmpi ne, %1, %c0_i32_0 : i32
    scf.if %2 {
      %cst_24 = arith.constant 0.000000e+00 : f32
      %40 = vector.broadcast %cst_24 : f32 to vector<128x1xf32>
      %c0_25 = arith.constant 0 : index
      %c0_26 = arith.constant 0 : index
      %41 = vector.load %arg6[%c0_25, %c0_26] : memref<128x1xf32, #tpu.memory_space<vmem>>, vector<128x1xf32>
      tpu.vector_store %arg6[%c0_25, %c0_26], %40 {strides = array<i32>} : memref<128x1xf32, #tpu.memory_space<vmem>>, vector<128x1xf32>,
      %cst_27 = arith.constant 0.000000e+00 : f32
      %42 = vector.broadcast %cst_27 : f32 to vector<128x1xf32>
      %c0_28 = arith.constant 0 : index
      %c0_29 = arith.constant 0 : index
      %43 = vector.load %arg7[%c0_28, %c0_29] : memref<128x1xf32, #tpu.memory_space<vmem>>, vector<128x1xf32>
      tpu.vector_store %arg7[%c0_28, %c0_29], %42 {strides = array<i32>} : memref<128x1xf32, #tpu.memory_space<vmem>>, vector<128x1xf32>,
    } else {
    }
    %c0 = arith.constant 0 : index
    %c0_1 = arith.constant 0 : index
    %3 = vector.load %arg2[%c0, %c0_1] : memref<128x128xbf16, #tpu.memory_space<vmem>>, vector<128x128xbf16>
    %c0_2 = arith.constant 0 : index
    %c0_3 = arith.constant 0 : index
    %4 = vector.load %arg3[%c0_2, %c0_3] : memref<128x128xbf16, #tpu.memory_space<vmem>>, vector<128x128xbf16>
    %cst = arith.constant dense<0.000000e+00> : vector<128x128xf32>
    %5 = tpu.matmul %3, %4, %cst {dimension_numbers = #tpu.dot_dimension_numbers<[1], [0], [0], [1], [0, 0, 1, 1], [], []>} : vector<128x128xbf16>, vector<128x128xbf16>, vector<128x128xf32> -> vector<128x128xf32>
    %c0_4 = arith.constant 0 : index
    %c0_5 = arith.constant 0 : index
    %6 = vector.load %arg4[%c0_4, %c0_5] : memref<128x128xi8, #tpu.memory_space<vmem>>, vector<128x128xi8>
    %c1_i8 = arith.constant 1 : i8
    %7 = vector.broadcast %c1_i8 : i8 to vector<128x128xi8>
    %8 = arith.andi %6, %7 : vector<128x128xi8>
    %c0_i8 = arith.constant 0 : i8
    %9 = vector.broadcast %c0_i8 : i8 to vector<128x128xi8>
    %10 = arith.cmpi ne, %8, %9 : vector<128x128xi8>
    %c2_i8 = arith.constant 2 : i8
    %11 = vector.broadcast %c2_i8 : i8 to vector<128x128xi8>
    %12 = arith.andi %6, %11 : vector<128x128xi8>
    %c0_i8_6 = arith.constant 0 : i8
    %13 = vector.broadcast %c0_i8_6 : i8 to vector<128x128xi8>
    %14 = arith.cmpi ne, %12, %13 : vector<128x128xi8>
    %cst_7 = arith.constant 5.000000e+01 : f32
    %15 = vector.broadcast %cst_7 : f32 to vector<128x128xf32>
    %16 = arith.mulf %15, %5 : vector<128x128xf32>
    %cst_8 = arith.constant 1.000000e+00 : f32
    %17 = vector.broadcast %cst_8 : f32 to vector<128x128xf32>
    %18 = arith.subf %5, %17 : vector<128x128xf32>
    %19 = math.exp %18 : vector<128x128xf32>
    %cst_9 = arith.constant -5.000000e+01 : f32
    %20 = vector.broadcast %cst_9 : f32 to vector<128x128xf32>
    %21 = arith.subf %20, %16 : vector<128x128xf32>
    %22 = math.exp %21 : vector<128x128xf32>
    %c0_10 = arith.constant 0 : index
    %c0_11 = arith.constant 0 : index
    %23 = vector.load %arg6[%c0_10, %c0_11] : memref<128x1xf32, #tpu.memory_space<vmem>>, vector<128x1xf32>
    %cst_12 = arith.constant 0.000000e+00 : f32
    %24 = vector.broadcast %cst_12 : f32 to vector<128x128xf32>
    %25 = arith.select %10, %19, %24 : vector<128x128xi1>, vector<128x128xf32>
    %cst_13 = arith.constant dense<0.000000e+00> : vector<128xf32>
    %26 = vector.multi_reduction <add>, %25, %cst_13 [1] : vector<128x128xf32> to vector<128xf32>
    %27 = vector.shape_cast %26 : vector<128xf32> to vector<128x1xf32>
    %28 = arith.addf %23, %27 : vector<128x1xf32>
    %c0_14 = arith.constant 0 : index
    %c0_15 = arith.constant 0 : index
    %29 = vector.load %arg6[%c0_14, %c0_15] : memref<128x1xf32, #tpu.memory_space<vmem>>, vector<128x1xf32>
    tpu.vector_store %arg6[%c0_14, %c0_15], %28 {strides = array<i32>} : memref<128x1xf32, #tpu.memory_space<vmem>>, vector<128x1xf32>,
    %c0_16 = arith.constant 0 : index
    %c0_17 = arith.constant 0 : index
    %30 = vector.load %arg7[%c0_16, %c0_17] : memref<128x1xf32, #tpu.memory_space<vmem>>, vector<128x1xf32>
    %cst_18 = arith.constant 0.000000e+00 : f32
    %31 = vector.broadcast %cst_18 : f32 to vector<128x128xf32>
    %32 = arith.select %14, %22, %31 : vector<128x128xi1>, vector<128x128xf32>
    %cst_19 = arith.constant dense<0.000000e+00> : vector<128xf32>
    %33 = vector.multi_reduction <add>, %32, %cst_19 [1] : vector<128x128xf32> to vector<128xf32>
    %34 = vector.shape_cast %33 : vector<128xf32> to vector<128x1xf32>
    %35 = arith.addf %30, %34 : vector<128x1xf32>
    %c0_20 = arith.constant 0 : index
    %c0_21 = arith.constant 0 : index
    %36 = vector.load %arg7[%c0_20, %c0_21] : memref<128x1xf32, #tpu.memory_space<vmem>>, vector<128x1xf32>
    tpu.vector_store %arg7[%c0_20, %c0_21], %35 {strides = array<i32>} : memref<128x1xf32, #tpu.memory_space<vmem>>, vector<128x1xf32>,
    %c0_i32_22 = arith.constant 0 : i32
    %37 = arith.cmpi eq, %arg1, %c0_i32_22 : i32
    %38 = arith.extui %37 : i1 to i32
    %c0_i32_23 = arith.constant 0 : i32
    %39 = arith.cmpi ne, %38, %c0_i32_23 : i32
    scf.if %39 {
      %c0_24 = arith.constant 0 : index
      %c0_25 = arith.constant 0 : index
      %40 = vector.load %arg6[%c0_24, %c0_25] : memref<128x1xf32, #tpu.memory_space<vmem>>, vector<128x1xf32>
      %c0_26 = arith.constant 0 : index
      %c0_27 = arith.constant 0 : index
      %41 = vector.load %arg7[%c0_26, %c0_27] : memref<128x1xf32, #tpu.memory_space<vmem>>, vector<128x1xf32>
      %cst_28 = arith.constant 0.36787945 : f32
      %42 = vector.broadcast %cst_28 : f32 to vector<128x1xf32>
      %43 = arith.addf %40, %42 : vector<128x1xf32>
      %44 = math.log %43 : vector<128x1xf32>
      %cst_29 = arith.constant 1.000000e+00 : f32
      %45 = vector.broadcast %cst_29 : f32 to vector<128x1xf32>
      %46 = arith.addf %44, %45 : vector<128x1xf32>
      %cst_30 = arith.constant 1.000000e+00 : f32
      %47 = vector.broadcast %cst_30 : f32 to vector<128x1xf32>
      %48 = arith.mulf %46, %47 : vector<128x1xf32>
      %cst_31 = arith.constant 1.92874989E-22 : f32
      %49 = vector.broadcast %cst_31 : f32 to vector<128x1xf32>
      %50 = arith.addf %41, %49 : vector<128x1xf32>
      %51 = math.log %50 : vector<128x1xf32>
      %cst_32 = arith.constant 5.000000e+01 : f32
      %52 = vector.broadcast %cst_32 : f32 to vector<128x1xf32>
      %53 = arith.addf %51, %52 : vector<128x1xf32>
      %cst_33 = arith.constant 2.000000e-02 : f32
      %54 = vector.broadcast %cst_33 : f32 to vector<128x1xf32>
      %55 = arith.mulf %53, %54 : vector<128x1xf32>
      %cst_34 = arith.constant 0.000000e+00 : f32
      %56 = vector.broadcast %cst_34 : f32 to vector<128x1xf32>
      %57 = arith.cmpf ogt, %40, %56 : vector<128x1xf32>
      %cst_35 = arith.constant 0.000000e+00 : f32
      %58 = vector.broadcast %cst_35 : f32 to vector<128x1xf32>
      %59 = arith.select %57, %48, %58 : vector<128x1xi1>, vector<128x1xf32>
      %cst_36 = arith.constant 0.000000e+00 : f32
      %60 = vector.broadcast %cst_36 : f32 to vector<128x1xf32>
      %61 = arith.cmpf ogt, %41, %60 : vector<128x1xf32>
      %cst_37 = arith.constant 0.000000e+00 : f32
      %62 = vector.broadcast %cst_37 : f32 to vector<128x1xf32>
      %63 = arith.select %61, %55, %62 : vector<128x1xi1>, vector<128x1xf32>
      %64 = arith.addf %59, %63 : vector<128x1xf32>
      %c0_38 = arith.constant 0 : index
      %c0_39 = arith.constant 0 : index
      %65 = vector.load %arg5[%c0_38, %c0_39] : memref<128x1xf32, #tpu.memory_space<vmem>>, vector<128x1xf32>
      tpu.vector_store %arg5[%c0_38, %c0_39], %64 {strides = array<i32>} : memref<128x1xf32, #tpu.memory_space<vmem>>, vector<128x1xf32>,
    } else {
    }
    return
  }
  func.func @transform_0(%arg0: i32, %arg1: i32) -> (i32, i32) {
    %c0_i32 = arith.constant 0 : i32
    %c0_i32_0 = arith.constant 0 : i32
    return %arg0, %c0_i32 : i32, i32
  }
  func.func @transform_1(%arg0: i32, %arg1: i32) -> (i32, i32) {
    %c0_i32 = arith.constant 0 : i32
    %c0_i32_0 = arith.constant 0 : i32
    return %c0_i32, %arg1 : i32, i32
  }
  func.func @transform_2(%arg0: i32, %arg1: i32) -> (i32, i32) {
    %c0_i32 = arith.constant 0 : i32
    return %arg0, %arg1 : i32, i32
  }
  func.func @transform_3(%arg0: i32, %arg1: i32) -> (i32, i32) {
    %c0_i32 = arith.constant 0 : i32
    %c0_i32_0 = arith.constant 0 : i32
    return %arg0, %c0_i32 : i32, i32
  }
}

</mosaic_0001>

<llo_original>
// kernel: tpu_custom_call.1
$region0: #{tpu_custom_call.1}
  #allocation0 [shape = 'u32[]', space=smem, size = 0x4, offset = 0x4, fixed_abs, tag = 'smem constant byte address 0x4 - core index']
  #allocation1 [shape = 'u32[72,128]{1,0:T(1,128)}', space=vmem, size = 0x9000, scoped, tag = 'internal scratch']
  #allocation2 [shape = 'f32[128,1]{1,0:T(8,128)}', space=vmem, size = 0x10000, scoped, tag = 'scratch operand']
  #allocation3 [shape = 'f32[128,1]{1,0:T(8,128)}', space=vmem, size = 0x10000, scoped, tag = 'scratch operand']
  %s0 = inlined_call_operand.hbm [shape: bf16[128,128], index: 0, kind: input, shape index: {}]
  %s1 = inlined_call_operand.hbm [shape: bf16[128,128], index: 1, kind: input, shape index: {}]
  %s2 = inlined_call_operand.hbm [shape: s8[128,128], index: 2, kind: input, shape index: {}]
  %s3 = inlined_call_operand.vmem [shape: f32[128,1], index: 3, kind: output, shape index: {}]
  %s4 = sld [smem:[#allocation0]]
  $region42: #{tpu_custom_call.1} parent=0
    _
  %s6 = ssub.s32 1, %s4
  %s7 = scalar_select 0, %s6, %s4
  $region1: #{tpu_custom_call.1} parent=0
    #allocation4 [shape = 'u8[32768]{0}', space=vmem, size = 0x8000, scoped, tag = 'input window, operand 0, single buffered']
    #allocation5 [shape = 's32[1]{0}', space=sflag, size = 0x4, scoped, tag = 'scoped memory for tpu_custom_call.1']
    #allocation6 [shape = 'u8[32768]{0}', space=vmem, size = 0x8000, scoped, tag = 'input window, operand 1, single buffered']
    #allocation7 [shape = 's32[1]{0}', space=sflag, size = 0x4, scoped, tag = 'scoped memory for tpu_custom_call.1']
    #allocation8 [shape = 'u8[16384]{0}', space=vmem, size = 0x4000, scoped, tag = 'input window, operand 2, single buffered']
    %8 = vsyncpa [#allocation5], 0
    %9 = vsyncpa [#allocation7], 0
    // Predicated region
    $region2: #{tpu_custom_call.1} parent=1 // pred_check
      _
    $region3: #{tpu_custom_call.1} parent=1 // pred_check_branch
      %11 = sbr.rel (0) target = $region5
    $region4: #{tpu_custom_call.1} parent=1 // pred_region
      %13 = vsyncadd [#allocation5], 0
      %s14 = sshll.u32 %s0, 4
      %s15 = int_to_ptr.hbm [resolvable:$true] %s14
      %s16 = sshll.u32 [#allocation4], 4
      %s17 = int_to_ptr.vmem [resolvable:$true] %s16
      %22 = dma.hbm_to_vmem [thread:$0]  %s15, 1024, %s17, [#allocation5], 64, 64, 4
    $region5: #{tpu_custom_call.1} parent=1 // pred_fallthru
      _
    // Predicated region
    $region6: #{tpu_custom_call.1} parent=1 // pred_check
      _
    $region7: #{tpu_custom_call.1} parent=1 // pred_check_branch
      %24 = sbr.rel (0) target = $region9
    $region8: #{tpu_custom_call.1} parent=1 // pred_region
      %26 = vsyncadd [#allocation7], 0
      %s27 = sshll.u32 %s1, 4
      %s28 = int_to_ptr.hbm [resolvable:$true] %s27
      %s29 = sshll.u32 [#allocation6], 4
      %s30 = int_to_ptr.vmem [resolvable:$true] %s29
      %35 = dma.hbm_to_vmem [thread:$0]  %s28, 1024, %s30, [#allocation7], 64, 64, 4
    $region9: #{tpu_custom_call.1} parent=1 // pred_fallthru
      _
    // Predicated region
    $region10: #{tpu_custom_call.1} parent=1 // pred_check
      _
    $region11: #{tpu_custom_call.1} parent=1 // pred_check_branch
      %37 = sbr.rel (0) target = $region13
    $region12: #{tpu_custom_call.1} parent=1 // pred_region
      %39 = vsyncadd [#allocation7], 0
      %s40 = sshll.u32 %s2, 4
      %s41 = int_to_ptr.hbm [resolvable:$true] %s40
      %s42 = sshll.u32 [#allocation8], 4
      %s43 = int_to_ptr.vmem [resolvable:$true] %s42
      %48 = dma.hbm_to_vmem [thread:$0]  %s41, 512, %s43, [#allocation7], 128, 128, 8
    $region13: #{tpu_custom_call.1} parent=1 // pred_fallthru
      _
    // Predicated region
    $region14: #{tpu_custom_call.1} parent=1 // pred_check
      _
    $region15: #{tpu_custom_call.1} parent=1 // pred_check_branch
      %50 = sbr.rel (0) target = $region17
    $region16: #{tpu_custom_call.1} parent=1 // pred_region
      %52 = dma.done [#allocation5], 1024
    $region17: #{tpu_custom_call.1} parent=1 // pred_fallthru
      _
    // Predicated region
    $region18: #{tpu_custom_call.1} parent=1 // pred_check
      _
    $region19: #{tpu_custom_call.1} parent=1 // pred_check_branch
      %54 = sbr.rel (0) target = $region21
    $region20: #{tpu_custom_call.1} parent=1 // pred_region
      %56 = dma.done [#allocation7], 1024
    $region21: #{tpu_custom_call.1} parent=1 // pred_fallthru
      _
    // Predicated region
    $region22: #{tpu_custom_call.1} parent=1 // pred_check
      _
    $region23: #{tpu_custom_call.1} parent=1 // pred_check_branch
      %58 = sbr.rel (0) target = $region25
    $region24: #{tpu_custom_call.1} parent=1 // pred_region
      %60 = dma.done [#allocation7], 512
    $region25: #{tpu_custom_call.1} parent=1 // pred_fallthru
      _
    %p64 = scmp.eq.s32.totalorder 0, 0
    // Predicated region
    $region26: #{tpu_custom_call.1} parent=1 // pred_check
      %p65 = pneg %p64
    $region27: #{tpu_custom_call.1} parent=1 // pred_check_branch
      %67 = sbr.rel (%p65) target = $region29
    $region28: #{tpu_custom_call.1} parent=1 // pred_region
      %vm68 = vcmask 7168
      %69 = vst.msk [vmem:[#allocation2] sm:$0xff] %vm68, 0.0
      %70 = vst.msk [vmem:[#allocation2 + $0x8] sm:$0xff] %vm68, 0.0
      %71 = vst.msk [vmem:[#allocation2 + $0x10] sm:$0xff] %vm68, 0.0
      %72 = vst.msk [vmem:[#allocation2 + $0x18] sm:$0xff] %vm68, 0.0
      %73 = vst.msk [vmem:[#allocation2 + $0x20] sm:$0xff] %vm68, 0.0
      %74 = vst.msk [vmem:[#allocation2 + $0x28] sm:$0xff] %vm68, 0.0
      %75 = vst.msk [vmem:[#allocation2 + $0x30] sm:$0xff] %vm68, 0.0
      %76 = vst.msk [vmem:[#allocation2 + $0x38] sm:$0xff] %vm68, 0.0
      %77 = vst.msk [vmem:[#allocation2 + $0x40] sm:$0xff] %vm68, 0.0
      %78 = vst.msk [vmem:[#allocation2 + $0x48] sm:$0xff] %vm68, 0.0
      %79 = vst.msk [vmem:[#allocation2 + $0x50] sm:$0xff] %vm68, 0.0
      %80 = vst.msk [vmem:[#allocation2 + $0x58] sm:$0xff] %vm68, 0.0
      %81 = vst.msk [vmem:[#allocation2 + $0x60] sm:$0xff] %vm68, 0.0
      %82 = vst.msk [vmem:[#allocation2 + $0x68] sm:$0xff] %vm68, 0.0
      %83 = vst.msk [vmem:[#allocation2 + $0x70] sm:$0xff] %vm68, 0.0
      %84 = vst.msk [vmem:[#allocation2 + $0x78] sm:$0xff] %vm68, 0.0
      %85 = vst.msk [vmem:[#allocation3] sm:$0xff] %vm68, 0.0
      %86 = vst.msk [vmem:[#allocation3 + $0x8] sm:$0xff] %vm68, 0.0
      %87 = vst.msk [vmem:[#allocation3 + $0x10] sm:$0xff] %vm68, 0.0
      %88 = vst.msk [vmem:[#allocation3 + $0x18] sm:$0xff] %vm68, 0.0
      %89 = vst.msk [vmem:[#allocation3 + $0x20] sm:$0xff] %vm68, 0.0
      %90 = vst.msk [vmem:[#allocation3 + $0x28] sm:$0xff] %vm68, 0.0
      %91 = vst.msk [vmem:[#allocation3 + $0x30] sm:$0xff] %vm68, 0.0
      %92 = vst.msk [vmem:[#allocation3 + $0x38] sm:$0xff] %vm68, 0.0
      %93 = vst.msk [vmem:[#allocation3 + $0x40] sm:$0xff] %vm68, 0.0
      %94 = vst.msk [vmem:[#allocation3 + $0x48] sm:$0xff] %vm68, 0.0
      %95 = vst.msk [vmem:[#allocation3 + $0x50] sm:$0xff] %vm68, 0.0
      %96 = vst.msk [vmem:[#allocation3 + $0x58] sm:$0xff] %vm68, 0.0
      %97 = vst.msk [vmem:[#allocation3 + $0x60] sm:$0xff] %vm68, 0.0
      %98 = vst.msk [vmem:[#allocation3 + $0x68] sm:$0xff] %vm68, 0.0
      %99 = vst.msk [vmem:[#allocation3 + $0x70] sm:$0xff] %vm68, 0.0
      %100 = vst.msk [vmem:[#allocation3 + $0x78] sm:$0xff] %vm68, 0.0
    $region29: #{tpu_custom_call.1} parent=1 // pred_fallthru
      _
    %v101 = vld [vmem:[#allocation4] sm:$0xf]
    %v102 = vld [vmem:[#allocation4 + $0x4] sm:$0xf]
    %v103 = vld [vmem:[#allocation4 + $0x8] sm:$0xf]
    %v104 = vld [vmem:[#allocation4 + $0xc] sm:$0xf]
    %v105 = vld [vmem:[#allocation4 + $0x10] sm:$0xf]
    %v106 = vld [vmem:[#allocation4 + $0x14] sm:$0xf]
    %v107 = vld [vmem:[#allocation4 + $0x18] sm:$0xf]
    %v108 = vld [vmem:[#allocation4 + $0x1c] sm:$0xf]
    %v109 = vld [vmem:[#allocation4 + $0x20] sm:$0xf]
    %v110 = vld [vmem:[#allocation4 + $0x24] sm:$0xf]
    %v111 = vld [vmem:[#allocation4 + $0x28] sm:$0xf]
    %v112 = vld [vmem:[#allocation4 + $0x2c] sm:$0xf]
    %v113 = vld [vmem:[#allocation4 + $0x30] sm:$0xf]
    %v114 = vld [vmem:[#allocation4 + $0x34] sm:$0xf]
    %v115 = vld [vmem:[#allocation4 + $0x38] sm:$0xf]
    %v116 = vld [vmem:[#allocation4 + $0x3c] sm:$0xf]
    %v117 = vld [vmem:[#allocation6] sm:$0xf]
    %v118 = vld [vmem:[#allocation6 + $0x4] sm:$0xf]
    %v119 = vld [vmem:[#allocation6 + $0x8] sm:$0xf]
    %v120 = vld [vmem:[#allocation6 + $0xc] sm:$0xf]
    %v121 = vld [vmem:[#allocation6 + $0x10] sm:$0xf]
    %v122 = vld [vmem:[#allocation6 + $0x14] sm:$0xf]
    %v123 = vld [vmem:[#allocation6 + $0x18] sm:$0xf]
    %v124 = vld [vmem:[#allocation6 + $0x1c] sm:$0xf]
    %v125 = vld [vmem:[#allocation6 + $0x20] sm:$0xf]
    %v126 = vld [vmem:[#allocation6 + $0x24] sm:$0xf]
    %v127 = vld [vmem:[#allocation6 + $0x28] sm:$0xf]
    %v128 = vld [vmem:[#allocation6 + $0x2c] sm:$0xf]
    %v129 = vld [vmem:[#allocation6 + $0x30] sm:$0xf]
    %v130 = vld [vmem:[#allocation6 + $0x34] sm:$0xf]
    %v131 = vld [vmem:[#allocation6 + $0x38] sm:$0xf]
    %v132 = vld [vmem:[#allocation6 + $0x3c] sm:$0xf]
    %v149 = vunpack.c.l.b16 %v101
    %v150 = vunpack.c.l.b16 %v102
    %v151 = vunpack.c.l.b16 %v103
    %v152 = vunpack.c.l.b16 %v104
    %v153 = vunpack.c.l.b16 %v105
    %v154 = vunpack.c.l.b16 %v106
    %v155 = vunpack.c.l.b16 %v107
    %v156 = vunpack.c.l.b16 %v108
    %v157 = vunpack.c.l.b16 %v109
    %v158 = vunpack.c.l.b16 %v110
    %v159 = vunpack.c.l.b16 %v111
    %v160 = vunpack.c.l.b16 %v112
    %v161 = vunpack.c.l.b16 %v113
    %v162 = vunpack.c.l.b16 %v114
    %v163 = vunpack.c.l.b16 %v115
    %v164 = vunpack.c.l.b16 %v116
    %v165 = vpack.c.b16 %v150, %v149
    %v166 = vpack.c.b16 %v152, %v151
    %v167 = vpack.c.b16 %v154, %v153
    %v168 = vpack.c.b16 %v156, %v155
    %v169 = vpack.c.b16 %v158, %v157
    %v170 = vpack.c.b16 %v160, %v159
    %v171 = vpack.c.b16 %v162, %v161
    %v172 = vpack.c.b16 %v164, %v163
    %v197 = vunpack.c.l.b16 %v117
    %v198 = vunpack.c.l.b16 %v118
    %v199 = vunpack.c.l.b16 %v119
    %v200 = vunpack.c.l.b16 %v120
    %v201 = vunpack.c.l.b16 %v121
    %v202 = vunpack.c.l.b16 %v122
    %v203 = vunpack.c.l.b16 %v123
    %v204 = vunpack.c.l.b16 %v124
    %v205 = vunpack.c.l.b16 %v125
    %v206 = vunpack.c.l.b16 %v126
    %v207 = vunpack.c.l.b16 %v127
    %v208 = vunpack.c.l.b16 %v128
    %v209 = vunpack.c.l.b16 %v129
    %v210 = vunpack.c.l.b16 %v130
    %v211 = vunpack.c.l.b16 %v131
    %v212 = vunpack.c.l.b16 %v132
    %v213 = vpack.c.b16 %v198, %v197
    %v214 = vpack.c.b16 %v200, %v199
    %v215 = vpack.c.b16 %v202, %v201
    %v216 = vpack.c.b16 %v204, %v203
    %v217 = vpack.c.b16 %v206, %v205
    %v218 = vpack.c.b16 %v208, %v207
    %v219 = vpack.c.b16 %v210, %v209
    %v220 = vpack.c.b16 %v212, %v211
    %229 = vmatpush.bf16.msra.mxu0 %v220
    %230 = vmatpush.bf16.msra.mxu0 %v219
    %231 = vmatpush.bf16.msra.mxu0 %v218
    %232 = vmatpush.bf16.msra.mxu0 %v217
    %233 = vmatpush.bf16.msra.mxu0 %v216
    %234 = vmatpush.bf16.msra.mxu0 %v215
    %235 = vmatpush.bf16.msra.mxu0 %v214
    %236 = vmatpush.bf16.msra.mxu0 %v213
    %237 = vmatmul.bf16.gmra.mxu0 %v165
    %v238 = vpop.f32.mrf.mxu0
    %v239 = vadd.f32 0.0, %v238
    %v240 = vpop.f32.mrf.mxu0
    %v241 = vadd.f32 0.0, %v240
    %242 = vmatmul.bf16.gmra.mxu0 %v166
    %v243 = vpop.f32.mrf.mxu0
    %v244 = vadd.f32 0.0, %v243
    %v245 = vpop.f32.mrf.mxu0
    %v246 = vadd.f32 0.0, %v245
    %247 = vmatmul.bf16.gmra.mxu0 %v167
    %v248 = vpop.f32.mrf.mxu0
    %v249 = vadd.f32 0.0, %v248
    %v250 = vpop.f32.mrf.mxu0
    %v251 = vadd.f32 0.0, %v250
    %252 = vmatmul.bf16.gmra.mxu0 %v168
    %v253 = vpop.f32.mrf.mxu0
    %v254 = vadd.f32 0.0, %v253
    %v255 = vpop.f32.mrf.mxu0
    %v256 = vadd.f32 0.0, %v255
    %257 = vmatmul.bf16.gmra.mxu0 %v169
    %v258 = vpop.f32.mrf.mxu0
    %v259 = vadd.f32 0.0, %v258
    %v260 = vpop.f32.mrf.mxu0
    %v261 = vadd.f32 0.0, %v260
    %262 = vmatmul.bf16.gmra.mxu0 %v170
    %v263 = vpop.f32.mrf.mxu0
    %v264 = vadd.f32 0.0, %v263
    %v265 = vpop.f32.mrf.mxu0
    %v266 = vadd.f32 0.0, %v265
    %267 = vmatmul.bf16.gmra.mxu0 %v171
    %v268 = vpop.f32.mrf.mxu0
    %v269 = vadd.f32 0.0, %v268
    %v270 = vpop.f32.mrf.mxu0
    %v271 = vadd.f32 0.0, %v270
    %272 = vmatmul.bf16.gmra.mxu0 %v172
    %v273 = vpop.f32.mrf.mxu0
    %v274 = vadd.f32 0.0, %v273
    %v275 = vpop.f32.mrf.mxu0
    %v276 = vadd.f32 0.0, %v275
    %277 = vdwg.mxu0
    %v278 = vld [vmem:[#allocation8] sm:$0xff]
    %v279 = vld [vmem:[#allocation8 + $0x8] sm:$0xff]
    %v280 = vld [vmem:[#allocation8 + $0x10] sm:$0xff]
    %v281 = vld [vmem:[#allocation8 + $0x18] sm:$0xff]
    %v282 = vand.u32 %v278, 16843009
    %v283 = vand.u32 %v279, 16843009
    %v284 = vand.u32 %v280, 16843009
    %v285 = vand.u32 %v281, 16843009
    %vm286 = vnez %v282
    %vm287 = vnez %v283
    %vm288 = vnez %v284
    %vm289 = vnez %v285
    %v290 = vand.u32 %v278, 33686018
    %v291 = vand.u32 %v279, 33686018
    %v292 = vand.u32 %v280, 33686018
    %v293 = vand.u32 %v281, 33686018
    %vm294 = vnez %v290
    %vm295 = vnez %v291
    %vm296 = vnez %v292
    %vm297 = vnez %v293
    %v298 = vmul.f32 %v239, 50.0
    %v299 = vmul.f32 %v241, 50.0
    %v300 = vmul.f32 %v244, 50.0
    %v301 = vmul.f32 %v246, 50.0
    %v302 = vmul.f32 %v249, 50.0
    %v303 = vmul.f32 %v251, 50.0
    %v304 = vmul.f32 %v254, 50.0
    %v305 = vmul.f32 %v256, 50.0
    %v306 = vmul.f32 %v259, 50.0
    %v307 = vmul.f32 %v261, 50.0
    %v308 = vmul.f32 %v264, 50.0
    %v309 = vmul.f32 %v266, 50.0
    %v310 = vmul.f32 %v269, 50.0
    %v311 = vmul.f32 %v271, 50.0
    %v312 = vmul.f32 %v274, 50.0
    %v313 = vmul.f32 %v276, 50.0
    %v314 = vsub.f32 %v239, 1.0
    %v315 = vsub.f32 %v241, 1.0
    %v316 = vsub.f32 %v244, 1.0
    %v317 = vsub.f32 %v246, 1.0
    %v318 = vsub.f32 %v249, 1.0
    %v319 = vsub.f32 %v251, 1.0
    %v320 = vsub.f32 %v254, 1.0
    %v321 = vsub.f32 %v256, 1.0
    %v322 = vsub.f32 %v259, 1.0
    %v323 = vsub.f32 %v261, 1.0
    %v324 = vsub.f32 %v264, 1.0
    %v325 = vsub.f32 %v266, 1.0
    %v326 = vsub.f32 %v269, 1.0
    %v327 = vsub.f32 %v271, 1.0
    %v328 = vsub.f32 %v274, 1.0
    %v329 = vsub.f32 %v276, 1.0
    %v330 = vmul.f32 %v314, 1.442695
    %v331 = vpow.pop %v330
    %v332 = vmul.f32 %v315, 1.442695
    %v333 = vpow.pop %v332
    %v334 = vmul.f32 %v316, 1.442695
    %v335 = vpow.pop %v334
    %v336 = vmul.f32 %v317, 1.442695
    %v337 = vpow.pop %v336
    %v338 = vmul.f32 %v318, 1.442695
    %v339 = vpow.pop %v338
    %v340 = vmul.f32 %v319, 1.442695
    %v341 = vpow.pop %v340
    %v342 = vmul.f32 %v320, 1.442695
    %v343 = vpow.pop %v342
    %v344 = vmul.f32 %v321, 1.442695
    %v345 = vpow.pop %v344
    %v346 = vmul.f32 %v322, 1.442695
    %v347 = vpow.pop %v346
    %v348 = vmul.f32 %v323, 1.442695
    %v349 = vpow.pop %v348
    %v350 = vmul.f32 %v324, 1.442695
    %v351 = vpow.pop %v350
    %v352 = vmul.f32 %v325, 1.442695
    %v353 = vpow.pop %v352
    %v354 = vmul.f32 %v326, 1.442695
    %v355 = vpow.pop %v354
    %v356 = vmul.f32 %v327, 1.442695
    %v357 = vpow.pop %v356
    %v358 = vmul.f32 %v328, 1.442695
    %v359 = vpow.pop %v358
    %v360 = vmul.f32 %v329, 1.442695
    %v361 = vpow.pop %v360
    %v362 = vsub.f32 -50.0, %v298
    %v363 = vsub.f32 -50.0, %v299
    %v364 = vsub.f32 -50.0, %v300
    %v365 = vsub.f32 -50.0, %v301
    %v366 = vsub.f32 -50.0, %v302
    %v367 = vsub.f32 -50.0, %v303
    %v368 = vsub.f32 -50.0, %v304
    %v369 = vsub.f32 -50.0, %v305
    %v370 = vsub.f32 -50.0, %v306
    %v371 = vsub.f32 -50.0, %v307
    %v372 = vsub.f32 -50.0, %v308
    %v373 = vsub.f32 -50.0, %v309
    %v374 = vsub.f32 -50.0, %v310
    %v375 = vsub.f32 -50.0, %v311
    %v376 = vsub.f32 -50.0, %v312
    %v377 = vsub.f32 -50.0, %v313
    %v378 = vmul.f32 %v362, 1.442695
    %v379 = vpow.pop %v378
    %v380 = vmul.f32 %v363, 1.442695
    %v381 = vpow.pop %v380
    %v382 = vmul.f32 %v364, 1.442695
    %v383 = vpow.pop %v382
    %v384 = vmul.f32 %v365, 1.442695
    %v385 = vpow.pop %v384
    %v386 = vmul.f32 %v366, 1.442695
    %v387 = vpow.pop %v386
    %v388 = vmul.f32 %v367, 1.442695
    %v389 = vpow.pop %v388
    %v390 = vmul.f32 %v368, 1.442695
    %v391 = vpow.pop %v390
    %v392 = vmul.f32 %v369, 1.442695
    %v393 = vpow.pop %v392
    %v394 = vmul.f32 %v370, 1.442695
    %v395 = vpow.pop %v394
    %v396 = vmul.f32 %v371, 1.442695
    %v397 = vpow.pop %v396
    %v398 = vmul.f32 %v372, 1.442695
    %v399 = vpow.pop %v398
    %v400 = vmul.f32 %v373, 1.442695
    %v401 = vpow.pop %v400
    %v402 = vmul.f32 %v374, 1.442695
    %v403 = vpow.pop %v402
    %v404 = vmul.f32 %v375, 1.442695
    %v405 = vpow.pop %v404
    %v406 = vmul.f32 %v376, 1.442695
    %v407 = vpow.pop %v406
    %v408 = vmul.f32 %v377, 1.442695
    %v409 = vpow.pop %v408
    %v410 = vld [vmem:[#allocation2] sm:$0xff]
    %v411 = vld [vmem:[#allocation2 + $0x8] sm:$0xff]
    %v412 = vld [vmem:[#allocation2 + $0x10] sm:$0xff]
    %v413 = vld [vmem:[#allocation2 + $0x18] sm:$0xff]
    %v414 = vld [vmem:[#allocation2 + $0x20] sm:$0xff]
    %v415 = vld [vmem:[#allocation2 + $0x28] sm:$0xff]
    %v416 = vld [vmem:[#allocation2 + $0x30] sm:$0xff]
    %v417 = vld [vmem:[#allocation2 + $0x38] sm:$0xff]
    %v418 = vld [vmem:[#allocation2 + $0x40] sm:$0xff]
    %v419 = vld [vmem:[#allocation2 + $0x48] sm:$0xff]
    %v420 = vld [vmem:[#allocation2 + $0x50] sm:$0xff]
    %v421 = vld [vmem:[#allocation2 + $0x58] sm:$0xff]
    %v422 = vld [vmem:[#allocation2 + $0x60] sm:$0xff]
    %v423 = vld [vmem:[#allocation2 + $0x68] sm:$0xff]
    %v424 = vld [vmem:[#allocation2 + $0x70] sm:$0xff]
    %v425 = vld [vmem:[#allocation2 + $0x78] sm:$0xff]
    %v426 = vsel %vm286, 16843009, 0
    %v427 = vsel %vm287, 16843009, 0
    %v428 = vsel %vm288, 16843009, 0
    %v429 = vsel %vm289, 16843009, 0
    %v430 = vunpack.c.0.s8 %v426
    %v431 = vunpack.c.1.s8 %v426
    %v432 = vunpack.c.2.s8 %v426
    %v433 = vunpack.c.3.s8 %v426
    %v434 = vunpack.c.0.s8 %v427
    %v435 = vunpack.c.1.s8 %v427
    %v436 = vunpack.c.2.s8 %v427
    %v437 = vunpack.c.3.s8 %v427
    %v438 = vunpack.c.0.s8 %v428
    %v439 = vunpack.c.1.s8 %v428
    %v440 = vunpack.c.2.s8 %v428
    %v441 = vunpack.c.3.s8 %v428
    %v442 = vunpack.c.0.s8 %v429
    %v443 = vunpack.c.1.s8 %v429
    %v444 = vunpack.c.2.s8 %v429
    %v445 = vunpack.c.3.s8 %v429
    %v446 = vpack.c.b16 %v430, %v430
    %v447 = vpack.c.b8 %v446, %v446
    %v448 = vpack.c.b16 %v431, %v431
    %v449 = vpack.c.b8 %v448, %v448
    %v450 = vpack.c.b16 %v432, %v432
    %v451 = vpack.c.b8 %v450, %v450
    %v452 = vpack.c.b16 %v433, %v433
    %v453 = vpack.c.b8 %v452, %v452
    %v454 = vpack.c.b16 %v434, %v434
    %v455 = vpack.c.b8 %v454, %v454
    %v456 = vpack.c.b16 %v435, %v435
    %v457 = vpack.c.b8 %v456, %v456
    %v458 = vpack.c.b16 %v436, %v436
    %v459 = vpack.c.b8 %v458, %v458
    %v460 = vpack.c.b16 %v437, %v437
    %v461 = vpack.c.b8 %v460, %v460
    %v462 = vpack.c.b16 %v438, %v438
    %v463 = vpack.c.b8 %v462, %v462
    %v464 = vpack.c.b16 %v439, %v439
    %v465 = vpack.c.b8 %v464, %v464
    %v466 = vpack.c.b16 %v440, %v440
    %v467 = vpack.c.b8 %v466, %v466
    %v468 = vpack.c.b16 %v441, %v441
    %v469 = vpack.c.b8 %v468, %v468
    %v470 = vpack.c.b16 %v442, %v442
    %v471 = vpack.c.b8 %v470, %v470
    %v472 = vpack.c.b16 %v443, %v443
    %v473 = vpack.c.b8 %v472, %v472
    %v474 = vpack.c.b16 %v444, %v444
    %v475 = vpack.c.b8 %v474, %v474
    %v476 = vpack.c.b16 %v445, %v445
    %v477 = vpack.c.b8 %v476, %v476
    %vm478 = vnez %v447
    %vm479 = vnez %v449
    %vm480 = vnez %v451
    %vm481 = vnez %v453
    %vm482 = vnez %v455
    %vm483 = vnez %v457
    %vm484 = vnez %v459
    %vm485 = vnez %v461
    %vm486 = vnez %v463
    %vm487 = vnez %v465
    %vm488 = vnez %v467
    %vm489 = vnez %v469
    %vm490 = vnez %v471
    %vm491 = vnez %v473
    %vm492 = vnez %v475
    %vm493 = vnez %v477
    %v494 = vsel %vm478, 16843009, 0
    %v495 = vsel %vm479, 16843009, 0
    %v496 = vsel %vm480, 16843009, 0
    %v497 = vsel %vm481, 16843009, 0
    %v498 = vsel %vm482, 16843009, 0
    %v499 = vsel %vm483, 16843009, 0
    %v500 = vsel %vm484, 16843009, 0
    %v501 = vsel %vm485, 16843009, 0
    %v502 = vsel %vm486, 16843009, 0
    %v503 = vsel %vm487, 16843009, 0
    %v504 = vsel %vm488, 16843009, 0
    %v505 = vsel %vm489, 16843009, 0
    %v506 = vsel %vm490, 16843009, 0
    %v507 = vsel %vm491, 16843009, 0
    %v508 = vsel %vm492, 16843009, 0
    %v509 = vsel %vm493, 16843009, 0
    %v510 = vunpack.c.0.s8 %v494
    %v511 = vunpack.c.0.s8 %v495
    %v512 = vunpack.c.0.s8 %v496
    %v513 = vunpack.c.0.s8 %v497
    %v514 = vunpack.c.0.s8 %v498
    %v515 = vunpack.c.0.s8 %v499
    %v516 = vunpack.c.0.s8 %v500
    %v517 = vunpack.c.0.s8 %v501
    %v518 = vunpack.c.0.s8 %v502
    %v519 = vunpack.c.0.s8 %v503
    %v520 = vunpack.c.0.s8 %v504
    %v521 = vunpack.c.0.s8 %v505
    %v522 = vunpack.c.0.s8 %v506
    %v523 = vunpack.c.0.s8 %v507
    %v524 = vunpack.c.0.s8 %v508
    %v525 = vunpack.c.0.s8 %v509
    %vm526 = vcmp.ne.s32.totalorder %v510, 0
    %vm527 = vcmp.ne.s32.totalorder %v511, 0
    %vm528 = vcmp.ne.s32.totalorder %v512, 0
    %vm529 = vcmp.ne.s32.totalorder %v513, 0
    %vm530 = vcmp.ne.s32.totalorder %v514, 0
    %vm531 = vcmp.ne.s32.totalorder %v515, 0
    %vm532 = vcmp.ne.s32.totalorder %v516, 0
    %vm533 = vcmp.ne.s32.totalorder %v517, 0
    %vm534 = vcmp.ne.s32.totalorder %v518, 0
    %vm535 = vcmp.ne.s32.totalorder %v519, 0
    %vm536 = vcmp.ne.s32.totalorder %v520, 0
    %vm537 = vcmp.ne.s32.totalorder %v521, 0
    %vm538 = vcmp.ne.s32.totalorder %v522, 0
    %vm539 = vcmp.ne.s32.totalorder %v523, 0
    %vm540 = vcmp.ne.s32.totalorder %v524, 0
    %vm541 = vcmp.ne.s32.totalorder %v525, 0
    %v542 = vsel %vm526, %v331, 0.0
    %v543 = vsel %vm527, %v333, 0.0
    %v544 = vsel %vm528, %v335, 0.0
    %v545 = vsel %vm529, %v337, 0.0
    %v546 = vsel %vm530, %v339, 0.0
    %v547 = vsel %vm531, %v341, 0.0
    %v548 = vsel %vm532, %v343, 0.0
    %v549 = vsel %vm533, %v345, 0.0
    %v550 = vsel %vm534, %v347, 0.0
    %v551 = vsel %vm535, %v349, 0.0
    %v552 = vsel %vm536, %v351, 0.0
    %v553 = vsel %vm537, %v353, 0.0
    %v554 = vsel %vm538, %v355, 0.0
    %v555 = vsel %vm539, %v357, 0.0
    %v556 = vsel %vm540, %v359, 0.0
    %v557 = vsel %vm541, %v361, 0.0
    %558 = vadd.xlane.f32.xlu0 %v542
    %v559 = vpop.xlane.xlu0 %558
    %560 = vadd.xlane.f32.xlu0 %v543
    %v561 = vpop.xlane.xlu0 %560
    %562 = vadd.xlane.f32.xlu0 %v544
    %v563 = vpop.xlane.xlu0 %562
    %564 = vadd.xlane.f32.xlu0 %v545
    %v565 = vpop.xlane.xlu0 %564
    %566 = vadd.xlane.f32.xlu0 %v546
    %v567 = vpop.xlane.xlu0 %566
    %568 = vadd.xlane.f32.xlu0 %v547
    %v569 = vpop.xlane.xlu0 %568
    %570 = vadd.xlane.f32.xlu0 %v548
    %v571 = vpop.xlane.xlu0 %570
    %572 = vadd.xlane.f32.xlu0 %v549
    %v573 = vpop.xlane.xlu0 %572
    %574 = vadd.xlane.f32.xlu0 %v550
    %v575 = vpop.xlane.xlu0 %574
    %576 = vadd.xlane.f32.xlu0 %v551
    %v577 = vpop.xlane.xlu0 %576
    %578 = vadd.xlane.f32.xlu0 %v552
    %v579 = vpop.xlane.xlu0 %578
    %580 = vadd.xlane.f32.xlu0 %v553
    %v581 = vpop.xlane.xlu0 %580
    %582 = vadd.xlane.f32.xlu0 %v554
    %v583 = vpop.xlane.xlu0 %582
    %584 = vadd.xlane.f32.xlu0 %v555
    %v585 = vpop.xlane.xlu0 %584
    %586 = vadd.xlane.f32.xlu0 %v556
    %v587 = vpop.xlane.xlu0 %586
    %588 = vadd.xlane.f32.xlu0 %v557
    %v589 = vpop.xlane.xlu0 %588
    %v590 = vadd.f32 %v410, %v559
    %v591 = vadd.f32 %v411, %v561
    %v592 = vadd.f32 %v412, %v563
    %v593 = vadd.f32 %v413, %v565
    %v594 = vadd.f32 %v414, %v567
    %v595 = vadd.f32 %v415, %v569
    %v596 = vadd.f32 %v416, %v571
    %v597 = vadd.f32 %v417, %v573
    %v598 = vadd.f32 %v418, %v575
    %v599 = vadd.f32 %v419, %v577
    %v600 = vadd.f32 %v420, %v579
    %v601 = vadd.f32 %v421, %v581
    %v602 = vadd.f32 %v422, %v583
    %v603 = vadd.f32 %v423, %v585
    %v604 = vadd.f32 %v424, %v587
    %v605 = vadd.f32 %v425, %v589
    %vm606 = vcmask 7168
    %607 = vst.msk [vmem:[#allocation2] sm:$0xff] %vm606, %v590
    %608 = vst.msk [vmem:[#allocation2 + $0x8] sm:$0xff] %vm606, %v591
    %609 = vst.msk [vmem:[#allocation2 + $0x10] sm:$0xff] %vm606, %v592
    %610 = vst.msk [vmem:[#allocation2 + $0x18] sm:$0xff] %vm606, %v593
    %611 = vst.msk [vmem:[#allocation2 + $0x20] sm:$0xff] %vm606, %v594
    %612 = vst.msk [vmem:[#allocation2 + $0x28] sm:$0xff] %vm606, %v595
    %613 = vst.msk [vmem:[#allocation2 + $0x30] sm:$0xff] %vm606, %v596
    %614 = vst.msk [vmem:[#allocation2 + $0x38] sm:$0xff] %vm606, %v597
    %615 = vst.msk [vmem:[#allocation2 + $0x40] sm:$0xff] %vm606, %v598
    %616 = vst.msk [vmem:[#allocation2 + $0x48] sm:$0xff] %vm606, %v599
    %617 = vst.msk [vmem:[#allocation2 + $0x50] sm:$0xff] %vm606, %v600
    %618 = vst.msk [vmem:[#allocation2 + $0x58] sm:$0xff] %vm606, %v601
    %619 = vst.msk [vmem:[#allocation2 + $0x60] sm:$0xff] %vm606, %v602
    %620 = vst.msk [vmem:[#allocation2 + $0x68] sm:$0xff] %vm606, %v603
    %621 = vst.msk [vmem:[#allocation2 + $0x70] sm:$0xff] %vm606, %v604
    %622 = vst.msk [vmem:[#allocation2 + $0x78] sm:$0xff] %vm606, %v605
    %v623 = vld [vmem:[#allocation3] sm:$0xff]
    %v624 = vld [vmem:[#allocation3 + $0x8] sm:$0xff]
    %v625 = vld [vmem:[#allocation3 + $0x10] sm:$0xff]
    %v626 = vld [vmem:[#allocation3 + $0x18] sm:$0xff]
    %v627 = vld [vmem:[#allocation3 + $0x20] sm:$0xff]
    %v628 = vld [vmem:[#allocation3 + $0x28] sm:$0xff]
    %v629 = vld [vmem:[#allocation3 + $0x30] sm:$0xff]
    %v630 = vld [vmem:[#allocation3 + $0x38] sm:$0xff]
    %v631 = vld [vmem:[#allocation3 + $0x40] sm:$0xff]
    %v632 = vld [vmem:[#allocation3 + $0x48] sm:$0xff]
    %v633 = vld [vmem:[#allocation3 + $0x50] sm:$0xff]
    %v634 = vld [vmem:[#allocation3 + $0x58] sm:$0xff]
    %v635 = vld [vmem:[#allocation3 + $0x60] sm:$0xff]
    %v636 = vld [vmem:[#allocation3 + $0x68] sm:$0xff]
    %v637 = vld [vmem:[#allocation3 + $0x70] sm:$0xff]
    %v638 = vld [vmem:[#allocation3 + $0x78] sm:$0xff]
    %v639 = vsel %vm294, 16843009, 0
    %v640 = vsel %vm295, 16843009, 0
    %v641 = vsel %vm296, 16843009, 0
    %v642 = vsel %vm297, 16843009, 0
    %v643 = vunpack.c.0.s8 %v639
    %v644 = vunpack.c.1.s8 %v639
    %v645 = vunpack.c.2.s8 %v639
    %v646 = vunpack.c.3.s8 %v639
    %v647 = vunpack.c.0.s8 %v640
    %v648 = vunpack.c.1.s8 %v640
    %v649 = vunpack.c.2.s8 %v640
    %v650 = vunpack.c.3.s8 %v640
    %v651 = vunpack.c.0.s8 %v641
    %v652 = vunpack.c.1.s8 %v641
    %v653 = vunpack.c.2.s8 %v641
    %v654 = vunpack.c.3.s8 %v641
    %v655 = vunpack.c.0.s8 %v642
    %v656 = vunpack.c.1.s8 %v642
    %v657 = vunpack.c.2.s8 %v642
    %v658 = vunpack.c.3.s8 %v642
    %v659 = vpack.c.b16 %v643, %v643
    %v660 = vpack.c.b8 %v659, %v659
    %v661 = vpack.c.b16 %v644, %v644
    %v662 = vpack.c.b8 %v661, %v661
    %v663 = vpack.c.b16 %v645, %v645
    %v664 = vpack.c.b8 %v663, %v663
    %v665 = vpack.c.b16 %v646, %v646
    %v666 = vpack.c.b8 %v665, %v665
    %v667 = vpack.c.b16 %v647, %v647
    %v668 = vpack.c.b8 %v667, %v667
    %v669 = vpack.c.b16 %v648, %v648
    %v670 = vpack.c.b8 %v669, %v669
    %v671 = vpack.c.b16 %v649, %v649
    %v672 = vpack.c.b8 %v671, %v671
    %v673 = vpack.c.b16 %v650, %v650
    %v674 = vpack.c.b8 %v673, %v673
    %v675 = vpack.c.b16 %v651, %v651
    %v676 = vpack.c.b8 %v675, %v675
    %v677 = vpack.c.b16 %v652, %v652
    %v678 = vpack.c.b8 %v677, %v677
    %v679 = vpack.c.b16 %v653, %v653
    %v680 = vpack.c.b8 %v679, %v679
    %v681 = vpack.c.b16 %v654, %v654
    %v682 = vpack.c.b8 %v681, %v681
    %v683 = vpack.c.b16 %v655, %v655
    %v684 = vpack.c.b8 %v683, %v683
    %v685 = vpack.c.b16 %v656, %v656
    %v686 = vpack.c.b8 %v685, %v685
    %v687 = vpack.c.b16 %v657, %v657
    %v688 = vpack.c.b8 %v687, %v687
    %v689 = vpack.c.b16 %v658, %v658
    %v690 = vpack.c.b8 %v689, %v689
    %vm691 = vnez %v660
    %vm692 = vnez %v662
    %vm693 = vnez %v664
    %vm694 = vnez %v666
    %vm695 = vnez %v668
    %vm696 = vnez %v670
    %vm697 = vnez %v672
    %vm698 = vnez %v674
    %vm699 = vnez %v676
    %vm700 = vnez %v678
    %vm701 = vnez %v680
    %vm702 = vnez %v682
    %vm703 = vnez %v684
    %vm704 = vnez %v686
    %vm705 = vnez %v688
    %vm706 = vnez %v690
    %v707 = vsel %vm691, 16843009, 0
    %v708 = vsel %vm692, 16843009, 0
    %v709 = vsel %vm693, 16843009, 0
    %v710 = vsel %vm694, 16843009, 0
    %v711 = vsel %vm695, 16843009, 0
    %v712 = vsel %vm696, 16843009, 0
    %v713 = vsel %vm697, 16843009, 0
    %v714 = vsel %vm698, 16843009, 0
    %v715 = vsel %vm699, 16843009, 0
    %v716 = vsel %vm700, 16843009, 0
    %v717 = vsel %vm701, 16843009, 0
    %v718 = vsel %vm702, 16843009, 0
    %v719 = vsel %vm703, 16843009, 0
    %v720 = vsel %vm704, 16843009, 0
    %v721 = vsel %vm705, 16843009, 0
    %v722 = vsel %vm706, 16843009, 0
    %v723 = vunpack.c.0.s8 %v707
    %v724 = vunpack.c.0.s8 %v708
    %v725 = vunpack.c.0.s8 %v709
    %v726 = vunpack.c.0.s8 %v710
    %v727 = vunpack.c.0.s8 %v711
    %v728 = vunpack.c.0.s8 %v712
    %v729 = vunpack.c.0.s8 %v713
    %v730 = vunpack.c.0.s8 %v714
    %v731 = vunpack.c.0.s8 %v715
    %v732 = vunpack.c.0.s8 %v716
    %v733 = vunpack.c.0.s8 %v717
    %v734 = vunpack.c.0.s8 %v718
    %v735 = vunpack.c.0.s8 %v719
    %v736 = vunpack.c.0.s8 %v720
    %v737 = vunpack.c.0.s8 %v721
    %v738 = vunpack.c.0.s8 %v722
    %vm739 = vcmp.ne.s32.totalorder %v723, 0
    %vm740 = vcmp.ne.s32.totalorder %v724, 0
    %vm741 = vcmp.ne.s32.totalorder %v725, 0
    %vm742 = vcmp.ne.s32.totalorder %v726, 0
    %vm743 = vcmp.ne.s32.totalorder %v727, 0
    %vm744 = vcmp.ne.s32.totalorder %v728, 0
    %vm745 = vcmp.ne.s32.totalorder %v729, 0
    %vm746 = vcmp.ne.s32.totalorder %v730, 0
    %vm747 = vcmp.ne.s32.totalorder %v731, 0
    %vm748 = vcmp.ne.s32.totalorder %v732, 0
    %vm749 = vcmp.ne.s32.totalorder %v733, 0
    %vm750 = vcmp.ne.s32.totalorder %v734, 0
    %vm751 = vcmp.ne.s32.totalorder %v735, 0
    %vm752 = vcmp.ne.s32.totalorder %v736, 0
    %vm753 = vcmp.ne.s32.totalorder %v737, 0
    %vm754 = vcmp.ne.s32.totalorder %v738, 0
    %v755 = vsel %vm739, %v379, 0.0
    %v756 = vsel %vm740, %v381, 0.0
    %v757 = vsel %vm741, %v383, 0.0
    %v758 = vsel %vm742, %v385, 0.0
    %v759 = vsel %vm743, %v387, 0.0
    %v760 = vsel %vm744, %v389, 0.0
    %v761 = vsel %vm745, %v391, 0.0
    %v762 = vsel %vm746, %v393, 0.0
    %v763 = vsel %vm747, %v395, 0.0
    %v764 = vsel %vm748, %v397, 0.0
    %v765 = vsel %vm749, %v399, 0.0
    %v766 = vsel %vm750, %v401, 0.0
    %v767 = vsel %vm751, %v403, 0.0
    %v768 = vsel %vm752, %v405, 0.0
    %v769 = vsel %vm753, %v407, 0.0
    %v770 = vsel %vm754, %v409, 0.0
    %771 = vadd.xlane.f32.xlu0 %v755
    %v772 = vpop.xlane.xlu0 %771
    %773 = vadd.xlane.f32.xlu0 %v756
    %v774 = vpop.xlane.xlu0 %773
    %775 = vadd.xlane.f32.xlu0 %v757
    %v776 = vpop.xlane.xlu0 %775
    %777 = vadd.xlane.f32.xlu0 %v758
    %v778 = vpop.xlane.xlu0 %777
    %779 = vadd.xlane.f32.xlu0 %v759
    %v780 = vpop.xlane.xlu0 %779
    %781 = vadd.xlane.f32.xlu0 %v760
    %v782 = vpop.xlane.xlu0 %781
    %783 = vadd.xlane.f32.xlu0 %v761
    %v784 = vpop.xlane.xlu0 %783
    %785 = vadd.xlane.f32.xlu0 %v762
    %v786 = vpop.xlane.xlu0 %785
    %787 = vadd.xlane.f32.xlu0 %v763
    %v788 = vpop.xlane.xlu0 %787
    %789 = vadd.xlane.f32.xlu0 %v764
    %v790 = vpop.xlane.xlu0 %789
    %791 = vadd.xlane.f32.xlu0 %v765
    %v792 = vpop.xlane.xlu0 %791
    %793 = vadd.xlane.f32.xlu0 %v766
    %v794 = vpop.xlane.xlu0 %793
    %795 = vadd.xlane.f32.xlu0 %v767
    %v796 = vpop.xlane.xlu0 %795
    %797 = vadd.xlane.f32.xlu0 %v768
    %v798 = vpop.xlane.xlu0 %797
    %799 = vadd.xlane.f32.xlu0 %v769
    %v800 = vpop.xlane.xlu0 %799
    %801 = vadd.xlane.f32.xlu0 %v770
    %v802 = vpop.xlane.xlu0 %801
    %v803 = vadd.f32 %v623, %v772
    %v804 = vadd.f32 %v624, %v774
    %v805 = vadd.f32 %v625, %v776
    %v806 = vadd.f32 %v626, %v778
    %v807 = vadd.f32 %v627, %v780
    %v808 = vadd.f32 %v628, %v782
    %v809 = vadd.f32 %v629, %v784
    %v810 = vadd.f32 %v630, %v786
    %v811 = vadd.f32 %v631, %v788
    %v812 = vadd.f32 %v632, %v790
    %v813 = vadd.f32 %v633, %v792
    %v814 = vadd.f32 %v634, %v794
    %v815 = vadd.f32 %v635, %v796
    %v816 = vadd.f32 %v636, %v798
    %v817 = vadd.f32 %v637, %v800
    %v818 = vadd.f32 %v638, %v802
    %819 = vst.msk [vmem:[#allocation3] sm:$0xff] %vm606, %v803
    %820 = vst.msk [vmem:[#allocation3 + $0x8] sm:$0xff] %vm606, %v804
    %821 = vst.msk [vmem:[#allocation3 + $0x10] sm:$0xff] %vm606, %v805
    %822 = vst.msk [vmem:[#allocation3 + $0x18] sm:$0xff] %vm606, %v806
    %823 = vst.msk [vmem:[#allocation3 + $0x20] sm:$0xff] %vm606, %v807
    %824 = vst.msk [vmem:[#allocation3 + $0x28] sm:$0xff] %vm606, %v808
    %825 = vst.msk [vmem:[#allocation3 + $0x30] sm:$0xff] %vm606, %v809
    %826 = vst.msk [vmem:[#allocation3 + $0x38] sm:$0xff] %vm606, %v810
    %827 = vst.msk [vmem:[#allocation3 + $0x40] sm:$0xff] %vm606, %v811
    %828 = vst.msk [vmem:[#allocation3 + $0x48] sm:$0xff] %vm606, %v812
    %829 = vst.msk [vmem:[#allocation3 + $0x50] sm:$0xff] %vm606, %v813
    %830 = vst.msk [vmem:[#allocation3 + $0x58] sm:$0xff] %vm606, %v814
    %831 = vst.msk [vmem:[#allocation3 + $0x60] sm:$0xff] %vm606, %v815
    %832 = vst.msk [vmem:[#allocation3 + $0x68] sm:$0xff] %vm606, %v816
    %833 = vst.msk [vmem:[#allocation3 + $0x70] sm:$0xff] %vm606, %v817
    %834 = vst.msk [vmem:[#allocation3 + $0x78] sm:$0xff] %vm606, %v818
    // Predicated region
    $region30: #{tpu_custom_call.1} parent=1 // pred_check
      %p835 = pneg %p64
    $region31: #{tpu_custom_call.1} parent=1 // pred_check_branch
      %837 = sbr.rel (%p835) target = $region33
    $region32: #{tpu_custom_call.1} parent=1 // pred_region
      %v838 = vld [vmem:[#allocation2] sm:$0xff]
      %v839 = vld [vmem:[#allocation2 + $0x8] sm:$0xff]
      %v840 = vld [vmem:[#allocation2 + $0x10] sm:$0xff]
      %v841 = vld [vmem:[#allocation2 + $0x18] sm:$0xff]
      %v842 = vld [vmem:[#allocation2 + $0x20] sm:$0xff]
      %v843 = vld [vmem:[#allocation2 + $0x28] sm:$0xff]
      %v844 = vld [vmem:[#allocation2 + $0x30] sm:$0xff]
      %v845 = vld [vmem:[#allocation2 + $0x38] sm:$0xff]
      %v846 = vld [vmem:[#allocation2 + $0x40] sm:$0xff]
      %v847 = vld [vmem:[#allocation2 + $0x48] sm:$0xff]
      %v848 = vld [vmem:[#allocation2 + $0x50] sm:$0xff]
      %v849 = vld [vmem:[#allocation2 + $0x58] sm:$0xff]
      %v850 = vld [vmem:[#allocation2 + $0x60] sm:$0xff]
      %v851 = vld [vmem:[#allocation2 + $0x68] sm:$0xff]
      %v852 = vld [vmem:[#allocation2 + $0x70] sm:$0xff]
      %v853 = vld [vmem:[#allocation2 + $0x78] sm:$0xff]
      %v854 = vld [vmem:[#allocation3] sm:$0xff]
      %v855 = vld [vmem:[#allocation3 + $0x8] sm:$0xff]
      %v856 = vld [vmem:[#allocation3 + $0x10] sm:$0xff]
      %v857 = vld [vmem:[#allocation3 + $0x18] sm:$0xff]
      %v858 = vld [vmem:[#allocation3 + $0x20] sm:$0xff]
      %v859 = vld [vmem:[#allocation3 + $0x28] sm:$0xff]
      %v860 = vld [vmem:[#allocation3 + $0x30] sm:$0xff]
      %v861 = vld [vmem:[#allocation3 + $0x38] sm:$0xff]
      %v862 = vld [vmem:[#allocation3 + $0x40] sm:$0xff]
      %v863 = vld [vmem:[#allocation3 + $0x48] sm:$0xff]
      %v864 = vld [vmem:[#allocation3 + $0x50] sm:$0xff]
      %v865 = vld [vmem:[#allocation3 + $0x58] sm:$0xff]
      %v866 = vld [vmem:[#allocation3 + $0x60] sm:$0xff]
      %v867 = vld [vmem:[#allocation3 + $0x68] sm:$0xff]
      %v868 = vld [vmem:[#allocation3 + $0x70] sm:$0xff]
      %v869 = vld [vmem:[#allocation3 + $0x78] sm:$0xff]
      %v870 = vadd.f32 %v838, 0.36787945
      %v871 = vadd.f32 %v839, 0.36787945
      %v872 = vadd.f32 %v840, 0.36787945
      %v873 = vadd.f32 %v841, 0.36787945
      %v874 = vadd.f32 %v842, 0.36787945
      %v875 = vadd.f32 %v843, 0.36787945
      %v876 = vadd.f32 %v844, 0.36787945
      %v877 = vadd.f32 %v845, 0.36787945
      %v878 = vadd.f32 %v846, 0.36787945
      %v879 = vadd.f32 %v847, 0.36787945
      %v880 = vadd.f32 %v848, 0.36787945
      %v881 = vadd.f32 %v849, 0.36787945
      %v882 = vadd.f32 %v850, 0.36787945
      %v883 = vadd.f32 %v851, 0.36787945
      %v884 = vadd.f32 %v852, 0.36787945
      %v885 = vadd.f32 %v853, 0.36787945
      %v886 = vlog2.pop %v870
      %v887 = vmul.f32 %v886, 0.6931472
      %v888 = vlog2.pop %v871
      %v889 = vmul.f32 %v888, 0.6931472
      %v890 = vlog2.pop %v872
      %v891 = vmul.f32 %v890, 0.6931472
      %v892 = vlog2.pop %v873
      %v893 = vmul.f32 %v892, 0.6931472
      %v894 = vlog2.pop %v874
      %v895 = vmul.f32 %v894, 0.6931472
      %v896 = vlog2.pop %v875
      %v897 = vmul.f32 %v896, 0.6931472
      %v898 = vlog2.pop %v876
      %v899 = vmul.f32 %v898, 0.6931472
      %v900 = vlog2.pop %v877
      %v901 = vmul.f32 %v900, 0.6931472
      %v902 = vlog2.pop %v878
      %v903 = vmul.f32 %v902, 0.6931472
      %v904 = vlog2.pop %v879
      %v905 = vmul.f32 %v904, 0.6931472
      %v906 = vlog2.pop %v880
      %v907 = vmul.f32 %v906, 0.6931472
      %v908 = vlog2.pop %v881
      %v909 = vmul.f32 %v908, 0.6931472
      %v910 = vlog2.pop %v882
      %v911 = vmul.f32 %v910, 0.6931472
      %v912 = vlog2.pop %v883
      %v913 = vmul.f32 %v912, 0.6931472
      %v914 = vlog2.pop %v884
      %v915 = vmul.f32 %v914, 0.6931472
      %v916 = vlog2.pop %v885
      %v917 = vmul.f32 %v916, 0.6931472
      %v918 = vadd.f32 %v887, 1.0
      %v919 = vadd.f32 %v889, 1.0
      %v920 = vadd.f32 %v891, 1.0
      %v921 = vadd.f32 %v893, 1.0
      %v922 = vadd.f32 %v895, 1.0
      %v923 = vadd.f32 %v897, 1.0
      %v924 = vadd.f32 %v899, 1.0
      %v925 = vadd.f32 %v901, 1.0
      %v926 = vadd.f32 %v903, 1.0
      %v927 = vadd.f32 %v905, 1.0
      %v928 = vadd.f32 %v907, 1.0
      %v929 = vadd.f32 %v909, 1.0
      %v930 = vadd.f32 %v911, 1.0
      %v931 = vadd.f32 %v913, 1.0
      %v932 = vadd.f32 %v915, 1.0
      %v933 = vadd.f32 %v917, 1.0
      %v934 = vadd.f32 %v854, 1.9287499e-22
      %v935 = vadd.f32 %v855, 1.9287499e-22
      %v936 = vadd.f32 %v856, 1.9287499e-22
      %v937 = vadd.f32 %v857, 1.9287499e-22
      %v938 = vadd.f32 %v858, 1.9287499e-22
      %v939 = vadd.f32 %v859, 1.9287499e-22
      %v940 = vadd.f32 %v860, 1.9287499e-22
      %v941 = vadd.f32 %v861, 1.9287499e-22
      %v942 = vadd.f32 %v862, 1.9287499e-22
      %v943 = vadd.f32 %v863, 1.9287499e-22
      %v944 = vadd.f32 %v864, 1.9287499e-22
      %v945 = vadd.f32 %v865, 1.9287499e-22
      %v946 = vadd.f32 %v866, 1.9287499e-22
      %v947 = vadd.f32 %v867, 1.9287499e-22
      %v948 = vadd.f32 %v868, 1.9287499e-22
      %v949 = vadd.f32 %v869, 1.9287499e-22
      %v950 = vlog2.pop %v934
      %v951 = vmul.f32 %v950, 0.6931472
      %v952 = vlog2.pop %v935
      %v953 = vmul.f32 %v952, 0.6931472
      %v954 = vlog2.pop %v936
      %v955 = vmul.f32 %v954, 0.6931472
      %v956 = vlog2.pop %v937
      %v957 = vmul.f32 %v956, 0.6931472
      %v958 = vlog2.pop %v938
      %v959 = vmul.f32 %v958, 0.6931472
      %v960 = vlog2.pop %v939
      %v961 = vmul.f32 %v960, 0.6931472
      %v962 = vlog2.pop %v940
      %v963 = vmul.f32 %v962, 0.6931472
      %v964 = vlog2.pop %v941
      %v965 = vmul.f32 %v964, 0.6931472
      %v966 = vlog2.pop %v942
      %v967 = vmul.f32 %v966, 0.6931472
      %v968 = vlog2.pop %v943
      %v969 = vmul.f32 %v968, 0.6931472
      %v970 = vlog2.pop %v944
      %v971 = vmul.f32 %v970, 0.6931472
      %v972 = vlog2.pop %v945
      %v973 = vmul.f32 %v972, 0.6931472
      %v974 = vlog2.pop %v946
      %v975 = vmul.f32 %v974, 0.6931472
      %v976 = vlog2.pop %v947
      %v977 = vmul.f32 %v976, 0.6931472
      %v978 = vlog2.pop %v948
      %v979 = vmul.f32 %v978, 0.6931472
      %v980 = vlog2.pop %v949
      %v981 = vmul.f32 %v980, 0.6931472
      %v982 = vadd.f32 %v951, 50.0
      %v983 = vadd.f32 %v953, 50.0
      %v984 = vadd.f32 %v955, 50.0
      %v985 = vadd.f32 %v957, 50.0
      %v986 = vadd.f32 %v959, 50.0
      %v987 = vadd.f32 %v961, 50.0
      %v988 = vadd.f32 %v963, 50.0
      %v989 = vadd.f32 %v965, 50.0
      %v990 = vadd.f32 %v967, 50.0
      %v991 = vadd.f32 %v969, 50.0
      %v992 = vadd.f32 %v971, 50.0
      %v993 = vadd.f32 %v973, 50.0
      %v994 = vadd.f32 %v975, 50.0
      %v995 = vadd.f32 %v977, 50.0
      %v996 = vadd.f32 %v979, 50.0
      %v997 = vadd.f32 %v981, 50.0
      %v998 = vmul.f32 %v982, 0.02
      %v999 = vmul.f32 %v983, 0.02
      %v1000 = vmul.f32 %v984, 0.02
      %v1001 = vmul.f32 %v985, 0.02
      %v1002 = vmul.f32 %v986, 0.02
      %v1003 = vmul.f32 %v987, 0.02
      %v1004 = vmul.f32 %v988, 0.02
      %v1005 = vmul.f32 %v989, 0.02
      %v1006 = vmul.f32 %v990, 0.02
      %v1007 = vmul.f32 %v991, 0.02
      %v1008 = vmul.f32 %v992, 0.02
      %v1009 = vmul.f32 %v993, 0.02
      %v1010 = vmul.f32 %v994, 0.02
      %v1011 = vmul.f32 %v995, 0.02
      %v1012 = vmul.f32 %v996, 0.02
      %v1013 = vmul.f32 %v997, 0.02
      %vm1014 = vcmp.gt.f32.partialorder %v838, 0.0
      %vm1015 = vcmp.gt.f32.partialorder %v839, 0.0
      %vm1016 = vcmp.gt.f32.partialorder %v840, 0.0
      %vm1017 = vcmp.gt.f32.partialorder %v841, 0.0
      %vm1018 = vcmp.gt.f32.partialorder %v842, 0.0
      %vm1019 = vcmp.gt.f32.partialorder %v843, 0.0
      %vm1020 = vcmp.gt.f32.partialorder %v844, 0.0
      %vm1021 = vcmp.gt.f32.partialorder %v845, 0.0
      %vm1022 = vcmp.gt.f32.partialorder %v846, 0.0
      %vm1023 = vcmp.gt.f32.partialorder %v847, 0.0
      %vm1024 = vcmp.gt.f32.partialorder %v848, 0.0
      %vm1025 = vcmp.gt.f32.partialorder %v849, 0.0
      %vm1026 = vcmp.gt.f32.partialorder %v850, 0.0
      %vm1027 = vcmp.gt.f32.partialorder %v851, 0.0
      %vm1028 = vcmp.gt.f32.partialorder %v852, 0.0
      %vm1029 = vcmp.gt.f32.partialorder %v853, 0.0
      %v1030 = vsel %vm1014, %v918, 0.0
      %v1031 = vsel %vm1015, %v919, 0.0
      %v1032 = vsel %vm1016, %v920, 0.0
      %v1033 = vsel %vm1017, %v921, 0.0
      %v1034 = vsel %vm1018, %v922, 0.0
      %v1035 = vsel %vm1019, %v923, 0.0
      %v1036 = vsel %vm1020, %v924, 0.0
      %v1037 = vsel %vm1021, %v925, 0.0
      %v1038 = vsel %vm1022, %v926, 0.0
      %v1039 = vsel %vm1023, %v927, 0.0
      %v1040 = vsel %vm1024, %v928, 0.0
      %v1041 = vsel %vm1025, %v929, 0.0
      %v1042 = vsel %vm1026, %v930, 0.0
      %v1043 = vsel %vm1027, %v931, 0.0
      %v1044 = vsel %vm1028, %v932, 0.0
      %v1045 = vsel %vm1029, %v933, 0.0
      %vm1046 = vcmp.gt.f32.partialorder %v854, 0.0
      %vm1047 = vcmp.gt.f32.partialorder %v855, 0.0
      %vm1048 = vcmp.gt.f32.partialorder %v856, 0.0
      %vm1049 = vcmp.gt.f32.partialorder %v857, 0.0
      %vm1050 = vcmp.gt.f32.partialorder %v858, 0.0
      %vm1051 = vcmp.gt.f32.partialorder %v859, 0.0
      %vm1052 = vcmp.gt.f32.partialorder %v860, 0.0
      %vm1053 = vcmp.gt.f32.partialorder %v861, 0.0
      %vm1054 = vcmp.gt.f32.partialorder %v862, 0.0
      %vm1055 = vcmp.gt.f32.partialorder %v863, 0.0
      %vm1056 = vcmp.gt.f32.partialorder %v864, 0.0
      %vm1057 = vcmp.gt.f32.partialorder %v865, 0.0
      %vm1058 = vcmp.gt.f32.partialorder %v866, 0.0
      %vm1059 = vcmp.gt.f32.partialorder %v867, 0.0
      %vm1060 = vcmp.gt.f32.partialorder %v868, 0.0
      %vm1061 = vcmp.gt.f32.partialorder %v869, 0.0
      %v1062 = vsel %vm1046, %v998, 0.0
      %v1063 = vsel %vm1047, %v999, 0.0
      %v1064 = vsel %vm1048, %v1000, 0.0
      %v1065 = vsel %vm1049, %v1001, 0.0
      %v1066 = vsel %vm1050, %v1002, 0.0
      %v1067 = vsel %vm1051, %v1003, 0.0
      %v1068 = vsel %vm1052, %v1004, 0.0
      %v1069 = vsel %vm1053, %v1005, 0.0
      %v1070 = vsel %vm1054, %v1006, 0.0
      %v1071 = vsel %vm1055, %v1007, 0.0
      %v1072 = vsel %vm1056, %v1008, 0.0
      %v1073 = vsel %vm1057, %v1009, 0.0
      %v1074 = vsel %vm1058, %v1010, 0.0
      %v1075 = vsel %vm1059, %v1011, 0.0
      %v1076 = vsel %vm1060, %v1012, 0.0
      %v1077 = vsel %vm1061, %v1013, 0.0
      %v1078 = vadd.f32 %v1030, %v1062
      %v1079 = vadd.f32 %v1031, %v1063
      %v1080 = vadd.f32 %v1032, %v1064
      %v1081 = vadd.f32 %v1033, %v1065
      %v1082 = vadd.f32 %v1034, %v1066
      %v1083 = vadd.f32 %v1035, %v1067
      %v1084 = vadd.f32 %v1036, %v1068
      %v1085 = vadd.f32 %v1037, %v1069
      %v1086 = vadd.f32 %v1038, %v1070
      %v1087 = vadd.f32 %v1039, %v1071
      %v1088 = vadd.f32 %v1040, %v1072
      %v1089 = vadd.f32 %v1041, %v1073
      %v1090 = vadd.f32 %v1042, %v1074
      %v1091 = vadd.f32 %v1043, %v1075
      %v1092 = vadd.f32 %v1044, %v1076
      %v1093 = vadd.f32 %v1045, %v1077
      %1094 = vst.msk [vmem:[%s3] sm:$0xff] %vm606, %v1078
      %1095 = vst.msk [vmem:[%s3 + $0x8] sm:$0xff] %vm606, %v1079
      %1096 = vst.msk [vmem:[%s3 + $0x10] sm:$0xff] %vm606, %v1080
      %1097 = vst.msk [vmem:[%s3 + $0x18] sm:$0xff] %vm606, %v1081
      %1098 = vst.msk [vmem:[%s3 + $0x20] sm:$0xff] %vm606, %v1082
      %1099 = vst.msk [vmem:[%s3 + $0x28] sm:$0xff] %vm606, %v1083
      %1100 = vst.msk [vmem:[%s3 + $0x30] sm:$0xff] %vm606, %v1084
      %1101 = vst.msk [vmem:[%s3 + $0x38] sm:$0xff] %vm606, %v1085
      %1102 = vst.msk [vmem:[%s3 + $0x40] sm:$0xff] %vm606, %v1086
      %1103 = vst.msk [vmem:[%s3 + $0x48] sm:$0xff] %vm606, %v1087
      %1104 = vst.msk [vmem:[%s3 + $0x50] sm:$0xff] %vm606, %v1088
      %1105 = vst.msk [vmem:[%s3 + $0x58] sm:$0xff] %vm606, %v1089
      %1106 = vst.msk [vmem:[%s3 + $0x60] sm:$0xff] %vm606, %v1090
      %1107 = vst.msk [vmem:[%s3 + $0x68] sm:$0xff] %vm606, %v1091
      %1108 = vst.msk [vmem:[%s3 + $0x70] sm:$0xff] %vm606, %v1092
      %1109 = vst.msk [vmem:[%s3 + $0x78] sm:$0xff] %vm606, %v1093
    $region33: #{tpu_custom_call.1} parent=1 // pred_fallthru
      _
    // Predicated region
    $region34: #{tpu_custom_call.1} parent=1 // pred_check
      _
    $region35: #{tpu_custom_call.1} parent=1 // pred_check_branch
      %1111 = sbr.rel (0) target = $region37
    $region36: #{tpu_custom_call.1} parent=1 // pred_region
      _
    $region37: #{tpu_custom_call.1} parent=1 // pred_fallthru
      _
    // Predicated region
    $region38: #{tpu_custom_call.1} parent=1 // pred_check
      _
    $region39: #{tpu_custom_call.1} parent=1 // pred_check_branch
      %1113 = sbr.rel (0) target = $region41
    $region40: #{tpu_custom_call.1} parent=1 // pred_region
      _
    $region41: #{tpu_custom_call.1} parent=1 // pred_fallthru
      _
    %1114 = vsyncpa [#allocation5], 1
    %1115 = vsyncpa [#allocation7], 1

</llo_original>
